<compile_context>
chip_gen: v7x
topology: tpu7x:2x2x1
jax: 0.10.0
libtpu: 0.0.40
codegen_flags: <defaults>
</compile_context>

<pallas_src>
import jax
import jax.numpy as jnp
from jax import lax
from jax.experimental import pallas as pl
from jax.experimental.pallas import tpu as pltpu


def _banded_conv_weight(w_hwio, n_out_cols):
    """Pack a (3,3,Ci,Co) conv weight into 3 banded matrices (one per dy).

    Result[dy] has shape ((n_out_cols+2)*Ci, n_out_cols*Co) with
    Result[dy][(u+dx)*Ci + c, u*Co + o] = w_hwio[dy, dx, c, o].
    """
    _, _, ci, co = w_hwio.shape
    n_in_cols = n_out_cols + 2
    mats = []
    for dy in range(3):
        m = sum(jnp.kron(jnp.eye(n_in_cols, n_out_cols, k=-dx, dtype=w_hwio.dtype),
                         w_hwio[dy, dx])
                for dx in range(3))
        mats.append(m)
    return jnp.stack(mats)  # (3, n_in_cols*Ci, n_out_cols*Co)


def basic_block_v2(x_nchw, params, eps=1e-5):
    """NCHW in / NCHW out. Fused conv1 -> bn2 -> relu -> conv2 -> (+ channel-pad skip)."""
    x = jnp.transpose(x_nchw, (0, 2, 3, 1)).astype(jnp.float32)  # NCHW -> NHWC
    B, H, W, Cin = x.shape
    Cout = params["w1"].shape[0]
    assert Cout >= Cin, "zero-pad channel shortcut requires Cout >= Cin"

    PW_in = (W + 4) * Cin                # packed width of the padded input rows
    PW_mid = (W + 2) * Cout              # packed width of the extended y1 rows
    PW_out = W * Cout                    # packed width of the output rows (lane-dense)

    # ---- bf16 operands for the MXU (f32 accumulation stays inside the kernel) ----
    xb = x.astype(jnp.bfloat16)
    w1 = jnp.transpose(params["w1"], (2, 3, 1, 0)).astype(jnp.bfloat16)   # OIHW->HWIO
    w2 = jnp.transpose(params["w2"], (2, 3, 1, 0)).astype(jnp.bfloat16)

    w1b = _banded_conv_weight(w1, W + 2)          # (3, PW_in,  PW_mid)
    w2b = _banded_conv_weight(w2, W)              # (3, PW_mid, PW_out)

    # ---- fold conv1 bias + eval-mode BatchNorm2d into per-channel scale/shift,
    #      then fold conv2's zero padding (invalid rows/cols of the extended y1)
    #      into 2-D scale/shift tables: relu(0*a + 0) = 0 on padded positions. ----
    scale = params["bn2_gamma"] / jnp.sqrt(params["bn2_var"] + eps)
    shift = scale * (params["b1"] - params["bn2_mean"]) + params["bn2_beta"]
    col_valid = jnp.concatenate([jnp.zeros((1,), jnp.float32),
                                 jnp.ones((W,), jnp.float32),
                                 jnp.zeros((1,), jnp.float32)])            # (W+2,)
    row_valid = jnp.concatenate([jnp.zeros((1,), jnp.float32),
                                 jnp.ones((H,), jnp.float32),
                                 jnp.zeros((1,), jnp.float32)])            # (H+2,)
    valid2d = row_valid[:, None, None] * col_valid[None, :, None]          # (H+2,W+2,1)
    scale2d = (valid2d * scale[None, None, :]).reshape(H + 2, PW_mid)
    shift2d = (valid2d * shift[None, None, :]).reshape(H + 2, PW_mid)

    # ---- packed, zero-padded input: (B, H+4, PW_in); no per-tile halo copies ----
    xpad = jnp.pad(xb, ((0, 0), (2, 2), (2, 2), (0, 0))).reshape(B, H + 4, PW_in)

    # ---- channel-zero-pad shortcut + conv2 bias, pre-packed lane-dense (f32) ----
    skip = jnp.pad(x, ((0, 0), (0, 0), (0, 0), (0, Cout - Cin))).reshape(B, H, PW_out)
    skip = skip + jnp.tile(params["b2"], W)[None, None, :]

    def kernel(x_ref, w1b_ref, scale_ref, shift_ref, w2b_ref, skip_ref, out_ref):
        # conv1 over the extended (H+2, W+2) region: 3 banded matmuls, K = PW_in
        acc1 = jnp.zeros((H + 2, PW_mid), jnp.float32)
        for dy in range(3):
            acc1 = acc1 + jnp.dot(x_ref[dy:dy + H + 2, :], w1b_ref[dy],
                                  preferred_element_type=jnp.float32)

        # bn2 (conv1 bias folded) + relu; conv2's zero padding (rows & cols of the
        # extended region outside the image) is already folded into scale/shift.
        y1 = jnp.maximum(acc1 * scale_ref[...] + shift_ref[...],
                         0.0).astype(jnp.bfloat16)

        # conv2: 3 banded matmuls, K = PW_mid; accumulator is (H, 128) in-register
        acc2 = jnp.zeros((H, PW_out), jnp.float32)
        for dy in range(3):
            acc2 = acc2 + jnp.dot(y1[dy:dy + H, :], w2b_ref[dy],
                                  preferred_element_type=jnp.float32)

        # epilogue on the VPU: + (channel-zero-pad shortcut + conv2 bias)
        out_ref[...] = (acc2 + skip_ref[...]).astype(out_ref.dtype)

    # true conv FLOPs (not the zero-band-inflated matmul count)
    flops = 2 * B * H * W * 9 * (Cin * Cout + Cout * Cout)
    bytes_acc = (xpad.size * 2 + w1b.size * 2 + w2b.size * 2
                 + (scale2d.size + shift2d.size + skip.size) * 4
                 + B * H * PW_out * 4)

    out_packed = pl.pallas_call(
        kernel,
        out_shape=jax.ShapeDtypeStruct((B, H, PW_out), jnp.float32),
        grid=(B,),
        in_specs=[
            pl.BlockSpec((None, H + 4, PW_in), lambda b: (b, 0, 0)),
            pl.BlockSpec((3, PW_in, PW_mid), lambda b: (0, 0, 0)),
            pl.BlockSpec((H + 2, PW_mid), lambda b: (0, 0)),
            pl.BlockSpec((H + 2, PW_mid), lambda b: (0, 0)),
            pl.BlockSpec((3, PW_mid, PW_out), lambda b: (0, 0, 0)),
            pl.BlockSpec((None, H, PW_out), lambda b: (b, 0, 0)),
        ],
        out_specs=pl.BlockSpec((None, H, PW_out), lambda b: (b, 0, 0)),
        compiler_params=pltpu.CompilerParams(
            dimension_semantics=("parallel",)),
        cost_estimate=pl.CostEstimate(flops=flops, transcendentals=0,
                                      bytes_accessed=bytes_acc),
    )(xpad, w1b, scale2d, shift2d, w2b, skip)

    out_nhwc = out_packed.reshape(B, H, W, Cout)
    return jnp.transpose(out_nhwc, (0, 3, 1, 2))  # NHWC -> NCHW


def basic_block_v2_reference(x_nchw, params, eps=1e-5):
    """Pure-JAX reference (XLA convs) mirroring the kernel's bf16/f32 precision."""
    x = jnp.transpose(x_nchw, (0, 2, 3, 1)).astype(jnp.float32)
    B, H, W, Cin = x.shape
    Cout = params["w1"].shape[0]
    dn = ("NHWC", "HWIO", "NHWC")

    xb = x.astype(jnp.bfloat16)
    w1 = jnp.transpose(params["w1"], (2, 3, 1, 0)).astype(jnp.bfloat16)
    w2 = jnp.transpose(params["w2"], (2, 3, 1, 0)).astype(jnp.bfloat16)

    y = lax.conv_general_dilated(xb, w1, (1, 1), "SAME", dimension_numbers=dn,
                                 preferred_element_type=jnp.float32) + params["b1"]
    y = (y - params["bn2_mean"]) / jnp.sqrt(params["bn2_var"] + eps)
    y = y * params["bn2_gamma"] + params["bn2_beta"]
    y = jnp.maximum(y, 0.0).astype(jnp.bfloat16)
    y = lax.conv_general_dilated(y, w2, (1, 1), "SAME", dimension_numbers=dn,
                                 preferred_element_type=jnp.float32) + params["b2"]
    skip = jnp.concatenate(
        [x, jnp.zeros(x.shape[:-1] + (Cout - Cin,), jnp.float32)], axis=-1)
    return jnp.transpose(y + skip, (0, 3, 1, 2))


def make_params(key, in_channels, out_channels):
    ks = jax.random.split(key, 8)
    return {
        # PyTorch Conv2d weight layout OIHW
        "w1": 0.2 * jax.random.normal(ks[0], (out_channels, in_channels, 3, 3), jnp.float32),
        "b1": 0.1 * jax.random.normal(ks[1], (out_channels,), jnp.float32),
        "w2": 0.2 * jax.random.normal(ks[2], (out_channels, out_channels, 3, 3), jnp.float32),
        "b2": 0.1 * jax.random.normal(ks[3], (out_channels,), jnp.float32),
        # BatchNorm2d(out_channels) — eval-mode running stats
        "bn2_gamma": 1.0 + 0.1 * jax.random.normal(ks[4], (out_channels,), jnp.float32),
        "bn2_beta": 0.1 * jax.random.normal(ks[5], (out_channels,), jnp.float32),
        "bn2_mean": 0.1 * jax.random.normal(ks[6], (out_channels,), jnp.float32),
        "bn2_var": jnp.abs(jax.random.normal(ks[7], (out_channels,), jnp.float32)) + 0.5,
    }


if __name__ == "__main__":
    key = jax.random.PRNGKey(0)
    kx, kp = jax.random.split(key)

    B, Cin, Cout, H, W = 2, 4, 8, 16, 16   # downsample=False, drop_probability=0
    x = jax.random.normal(kx, (B, Cin, H, W), jnp.float32)   # NCHW like PyTorch
    params = make_params(kp, Cin, Cout)

    out = jax.block_until_ready(basic_block_v2(x, params))
    ref = jax.block_until_ready(basic_block_v2_reference(x, params))

    assert out.shape == (B, Cout, H, W), out.shape
    assert jnp.allclose(out, ref, atol=2e-2, rtol=2e-2), float(jnp.max(jnp.abs(out - ref)))
    print("KERNEL_OK")
</pallas_src>

<mosaic_0001>
module attributes {stable_mosaic.version = 11 : i64} {
  func.func @kernel(%arg0: i32, %arg1: memref<1x20x80xbf16, #tpu.memory_space<vmem>>, %arg2: memref<3x80x144xbf16, #tpu.memory_space<vmem>>, %arg3: memref<18x144xf32, #tpu.memory_space<vmem>>, %arg4: memref<18x144xf32, #tpu.memory_space<vmem>>, %arg5: memref<3x144x128xbf16, #tpu.memory_space<vmem>>, %arg6: memref<1x16x128xf32, #tpu.memory_space<vmem>>, %arg7: memref<1x16x128xf32, #tpu.memory_space<vmem>>) attributes {dimension_semantics = [#tpu.dimension_semantics<parallel>], iteration_bounds = array<i64: 2>, scalar_prefetch = 0 : i64, scratch_operands = 0 : i64, tpu.core_type = #tpu.core_type<tc>, window_params = [{transform_indices = @transform_0, window_bounds = array<i64: 1, 20, 80>}, {pipeline_mode = #tpu.pipeline_mode<synchronous>, transform_indices = @transform_1, window_bounds = array<i64: 3, 80, 144>}, {pipeline_mode = #tpu.pipeline_mode<synchronous>, transform_indices = @transform_2, window_bounds = array<i64: 18, 144>}, {pipeline_mode = #tpu.pipeline_mode<synchronous>, transform_indices = @transform_3, window_bounds = array<i64: 18, 144>}, {pipeline_mode = #tpu.pipeline_mode<synchronous>, transform_indices = @transform_4, window_bounds = array<i64: 3, 144, 128>}, {transform_indices = @transform_5, window_bounds = array<i64: 1, 16, 128>}, {transform_indices = @transform_6, window_bounds = array<i64: 1, 16, 128>}]} {
    %cst = arith.constant 0.000000e+00 : f32
    %0 = vector.broadcast %cst : f32 to vector<18x144xf32>
    %c0 = arith.constant 0 : index
    %c0_0 = arith.constant 0 : index
    %c0_1 = arith.constant 0 : index
    %1 = vector.load %arg1[%c0, %c0_0, %c0_1] : memref<1x20x80xbf16, #tpu.memory_space<vmem>>, vector<1x18x80xbf16>
    %2 = vector.shape_cast %1 : vector<1x18x80xbf16> to vector<18x80xbf16>
    %c0_2 = arith.constant 0 : index
    %c0_3 = arith.constant 0 : index
    %c0_4 = arith.constant 0 : index
    %3 = vector.load %arg2[%c0_2, %c0_3, %c0_4] : memref<3x80x144xbf16, #tpu.memory_space<vmem>>, vector<1x80x144xbf16>
    %4 = vector.shape_cast %3 : vector<1x80x144xbf16> to vector<80x144xbf16>
    %cst_5 = arith.constant dense<0.000000e+00> : vector<18x144xf32>
    %5 = tpu.matmul %2, %4, %cst_5 {dimension_numbers = #tpu.dot_dimension_numbers<[1], [0], [0], [1], [0, 0, 1, 1], [], []>} : vector<18x80xbf16>, vector<80x144xbf16>, vector<18x144xf32> -> vector<18x144xf32>
    %6 = arith.addf %0, %5 : vector<18x144xf32>
    %c0_6 = arith.constant 0 : index
    %c1 = arith.constant 1 : index
    %c0_7 = arith.constant 0 : index
    %7 = vector.load %arg1[%c0_6, %c1, %c0_7] : memref<1x20x80xbf16, #tpu.memory_space<vmem>>, vector<1x18x80xbf16>
    %8 = vector.shape_cast %7 : vector<1x18x80xbf16> to vector<18x80xbf16>
    %c1_8 = arith.constant 1 : index
    %c0_9 = arith.constant 0 : index
    %c0_10 = arith.constant 0 : index
    %9 = vector.load %arg2[%c1_8, %c0_9, %c0_10] : memref<3x80x144xbf16, #tpu.memory_space<vmem>>, vector<1x80x144xbf16>
    %10 = vector.shape_cast %9 : vector<1x80x144xbf16> to vector<80x144xbf16>
    %cst_11 = arith.constant dense<0.000000e+00> : vector<18x144xf32>
    %11 = tpu.matmul %8, %10, %cst_11 {dimension_numbers = #tpu.dot_dimension_numbers<[1], [0], [0], [1], [0, 0, 1, 1], [], []>} : vector<18x80xbf16>, vector<80x144xbf16>, vector<18x144xf32> -> vector<18x144xf32>
    %12 = arith.addf %6, %11 : vector<18x144xf32>
    %c0_12 = arith.constant 0 : index
    %c2 = arith.constant 2 : index
    %c0_13 = arith.constant 0 : index
    %13 = vector.load %arg1[%c0_12, %c2, %c0_13] : memref<1x20x80xbf16, #tpu.memory_space<vmem>>, vector<1x18x80xbf16>
    %14 = vector.shape_cast %13 : vector<1x18x80xbf16> to vector<18x80xbf16>
    %c2_14 = arith.constant 2 : index
    %c0_15 = arith.constant 0 : index
    %c0_16 = arith.constant 0 : index
    %15 = vector.load %arg2[%c2_14, %c0_15, %c0_16] : memref<3x80x144xbf16, #tpu.memory_space<vmem>>, vector<1x80x144xbf16>
    %16 = vector.shape_cast %15 : vector<1x80x144xbf16> to vector<80x144xbf16>
    %cst_17 = arith.constant dense<0.000000e+00> : vector<18x144xf32>
    %17 = tpu.matmul %14, %16, %cst_17 {dimension_numbers = #tpu.dot_dimension_numbers<[1], [0], [0], [1], [0, 0, 1, 1], [], []>} : vector<18x80xbf16>, vector<80x144xbf16>, vector<18x144xf32> -> vector<18x144xf32>
    %18 = arith.addf %12, %17 : vector<18x144xf32>
    %c0_18 = arith.constant 0 : index
    %c0_19 = arith.constant 0 : index
    %19 = vector.load %arg3[%c0_18, %c0_19] : memref<18x144xf32, #tpu.memory_space<vmem>>, vector<18x144xf32>
    %20 = arith.mulf %18, %19 : vector<18x144xf32>
    %c0_20 = arith.constant 0 : index
    %c0_21 = arith.constant 0 : index
    %21 = vector.load %arg4[%c0_20, %c0_21] : memref<18x144xf32, #tpu.memory_space<vmem>>, vector<18x144xf32>
    %22 = arith.addf %20, %21 : vector<18x144xf32>
    %cst_22 = arith.constant 0.000000e+00 : f32
    %23 = vector.broadcast %cst_22 : f32 to vector<18x144xf32>
    %24 = arith.maximumf %22, %23 : vector<18x144xf32>
    %25 = arith.truncf %24 : vector<18x144xf32> to vector<18x144xbf16>
    %cst_23 = arith.constant 0.000000e+00 : f32
    %26 = vector.broadcast %cst_23 : f32 to vector<16x128xf32>
    %27 = vector.extract_strided_slice %25 {offsets = [0, 0], sizes = [16, 144], strides = [1, 1]} : vector<18x144xbf16> to vector<16x144xbf16>
    %c0_24 = arith.constant 0 : index
    %c0_25 = arith.constant 0 : index
    %c0_26 = arith.constant 0 : index
    %28 = vector.load %arg5[%c0_24, %c0_25, %c0_26] : memref<3x144x128xbf16, #tpu.memory_space<vmem>>, vector<1x144x128xbf16>
    %29 = vector.shape_cast %28 : vector<1x144x128xbf16> to vector<144x128xbf16>
    %cst_27 = arith.constant dense<0.000000e+00> : vector<16x128xf32>
    %30 = tpu.matmul %27, %29, %cst_27 {dimension_numbers = #tpu.dot_dimension_numbers<[1], [0], [0], [1], [0, 0, 1, 1], [], []>} : vector<16x144xbf16>, vector<144x128xbf16>, vector<16x128xf32> -> vector<16x128xf32>
    %31 = arith.addf %26, %30 : vector<16x128xf32>
    %32 = vector.extract_strided_slice %25 {offsets = [1, 0], sizes = [16, 144], strides = [1, 1]} : vector<18x144xbf16> to vector<16x144xbf16>
    %c1_28 = arith.constant 1 : index
    %c0_29 = arith.constant 0 : index
    %c0_30 = arith.constant 0 : index
    %33 = vector.load %arg5[%c1_28, %c0_29, %c0_30] : memref<3x144x128xbf16, #tpu.memory_space<vmem>>, vector<1x144x128xbf16>
    %34 = vector.shape_cast %33 : vector<1x144x128xbf16> to vector<144x128xbf16>
    %cst_31 = arith.constant dense<0.000000e+00> : vector<16x128xf32>
    %35 = tpu.matmul %32, %34, %cst_31 {dimension_numbers = #tpu.dot_dimension_numbers<[1], [0], [0], [1], [0, 0, 1, 1], [], []>} : vector<16x144xbf16>, vector<144x128xbf16>, vector<16x128xf32> -> vector<16x128xf32>
    %36 = arith.addf %31, %35 : vector<16x128xf32>
    %37 = vector.extract_strided_slice %25 {offsets = [2, 0], sizes = [16, 144], strides = [1, 1]} : vector<18x144xbf16> to vector<16x144xbf16>
    %c2_32 = arith.constant 2 : index
    %c0_33 = arith.constant 0 : index
    %c0_34 = arith.constant 0 : index
    %38 = vector.load %arg5[%c2_32, %c0_33, %c0_34] : memref<3x144x128xbf16, #tpu.memory_space<vmem>>, vector<1x144x128xbf16>
    %39 = vector.shape_cast %38 : vector<1x144x128xbf16> to vector<144x128xbf16>
    %cst_35 = arith.constant dense<0.000000e+00> : vector<16x128xf32>
    %40 = tpu.matmul %37, %39, %cst_35 {dimension_numbers = #tpu.dot_dimension_numbers<[1], [0], [0], [1], [0, 0, 1, 1], [], []>} : vector<16x144xbf16>, vector<144x128xbf16>, vector<16x128xf32> -> vector<16x128xf32>
    %41 = arith.addf %36, %40 : vector<16x128xf32>
    %c0_36 = arith.constant 0 : index
    %c0_37 = arith.constant 0 : index
    %c0_38 = arith.constant 0 : index
    %42 = vector.load %arg6[%c0_36, %c0_37, %c0_38] : memref<1x16x128xf32, #tpu.memory_space<vmem>>, vector<1x16x128xf32>
    %43 = vector.shape_cast %42 : vector<1x16x128xf32> to vector<16x128xf32>
    %44 = arith.addf %41, %43 : vector<16x128xf32>
    %c0_39 = arith.constant 0 : index
    %c0_40 = arith.constant 0 : index
    %c0_41 = arith.constant 0 : index
    %45 = vector.load %arg7[%c0_39, %c0_40, %c0_41] : memref<1x16x128xf32, #tpu.memory_space<vmem>>, vector<1x16x128xf32>
    %46 = vector.shape_cast %45 : vector<1x16x128xf32> to vector<16x128xf32>
    %47 = vector.shape_cast %44 : vector<16x128xf32> to vector<1x16x128xf32>
    tpu.vector_store %arg7[%c0_39, %c0_40, %c0_41], %47 {strides = array<i32>} : memref<1x16x128xf32, #tpu.memory_space<vmem>>, vector<1x16x128xf32>,
    return
  }
  func.func @transform_0(%arg0: i32) -> (i32, i32, i32) {
    %c0_i32 = arith.constant 0 : i32
    %c0_i32_0 = arith.constant 0 : i32
    %c0_i32_1 = arith.constant 0 : i32
    return %arg0, %c0_i32, %c0_i32_0 : i32, i32, i32
  }
  func.func @transform_1(%arg0: i32) -> (i32, i32, i32) {
    %c0_i32 = arith.constant 0 : i32
    %c0_i32_0 = arith.constant 0 : i32
    %c0_i32_1 = arith.constant 0 : i32
    %c0_i32_2 = arith.constant 0 : i32
    return %c0_i32, %c0_i32_0, %c0_i32_1 : i32, i32, i32
  }
  func.func @transform_2(%arg0: i32) -> (i32, i32) {
    %c0_i32 = arith.constant 0 : i32
    %c0_i32_0 = arith.constant 0 : i32
    %c0_i32_1 = arith.constant 0 : i32
    return %c0_i32, %c0_i32_0 : i32, i32
  }
  func.func @transform_3(%arg0: i32) -> (i32, i32) {
    %c0_i32 = arith.constant 0 : i32
    %c0_i32_0 = arith.constant 0 : i32
    %c0_i32_1 = arith.constant 0 : i32
    return %c0_i32, %c0_i32_0 : i32, i32
  }
  func.func @transform_4(%arg0: i32) -> (i32, i32, i32) {
    %c0_i32 = arith.constant 0 : i32
    %c0_i32_0 = arith.constant 0 : i32
    %c0_i32_1 = arith.constant 0 : i32
    %c0_i32_2 = arith.constant 0 : i32
    return %c0_i32, %c0_i32_0, %c0_i32_1 : i32, i32, i32
  }
  func.func @transform_5(%arg0: i32) -> (i32, i32, i32) {
    %c0_i32 = arith.constant 0 : i32
    %c0_i32_0 = arith.constant 0 : i32
    %c0_i32_1 = arith.constant 0 : i32
    return %arg0, %c0_i32, %c0_i32_0 : i32, i32, i32
  }
  func.func @transform_6(%arg0: i32) -> (i32, i32, i32) {
    %c0_i32 = arith.constant 0 : i32
    %c0_i32_0 = arith.constant 0 : i32
    %c0_i32_1 = arith.constant 0 : i32
    return %arg0, %c0_i32, %c0_i32_0 : i32, i32, i32
  }
}

</mosaic_0001>

<llo_original>
// kernel: tpu_custom_call.1
$region0: #{tpu_custom_call.1}
  #allocation0 [shape = 'u32[]', space=smem, size = 0x4, offset = 0x4, fixed_abs, tag = 'smem constant byte address 0x4 - core index']
  #allocation1 [shape = 'u32[144,128]{1,0:T(1,128)}', space=vmem, size = 0x12000, scoped, tag = 'internal scratch']
  %s0 = inlined_call_operand.vmem [shape: bf16[2,20,80], index: 0, kind: input, shape index: {}]
  %s1 = inlined_call_operand.vmem [shape: bf16[3,80,144], index: 1, kind: input, shape index: {}]
  %s2 = inlined_call_operand.vmem [shape: f32[18,144], index: 2, kind: input, shape index: {}]
  %s3 = inlined_call_operand.vmem [shape: f32[18,144], index: 3, kind: input, shape index: {}]
  %s4 = inlined_call_operand.vmem [shape: bf16[3,144,128], index: 4, kind: input, shape index: {}]
  %s5 = inlined_call_operand.vmem [shape: f32[2,16,128], index: 5, kind: input, shape index: {}]
  %s6 = inlined_call_operand.hbm [shape: f32[2,16,128], index: 6, kind: output, shape index: {}]
  %s7 = sld [smem:[#allocation0]]
  $region57: #{tpu_custom_call.1} parent=0
    _
  %s9 = ssub.s32 1, %s7
  %s10 = scalar_select 0, %s9, %s7
  $region1: #{tpu_custom_call.1} parent=0
    #allocation2 [shape = 'u8[16384]{0}', space=vmem, size = 0x4000, scoped, tag = 'output window, operand 0']
    #allocation3 [shape = 's32[2]{0}', space=sflag, size = 0x8, scoped, tag = 'scoped memory for tpu_custom_call.1']
    %11 = vsyncpa [#allocation3], 0
    %s12 = scalar_lea.sflag [#allocation3], 1
    %13 = vsyncpa %s12, 0
    loop: start=0, step=1, limit=4
    $region2: #{tpu_custom_call.1} parent=1 // loop_pre_header
      _
    $region3: #{tpu_custom_call.1} parent=1 // loop_header
      %s15 = sphi 0, %s19
      %p16 = scmp.ge.s32.totalorder %s15, 4
      %s25 = sphi 0, %s27
      %s28 = sphi 0, %s25
      %s29 = sphi 0, %s28
      %s45 = sphi 0, %s29
      %s49 = sphi 0, %s49
      %s51 = sphi 0, %s49
      %s52 = sphi 0, %s51
      %s66 = sphi 0, %s52
      %s70 = sphi 0, %s70
      %s72 = sphi 0, %s70
      %s73 = sphi 0, %s72
      %s87 = sphi 0, %s73
      %s91 = sphi 0, %s91
      %s93 = sphi 0, %s91
      %s94 = sphi 0, %s93
      %s108 = sphi 0, %s94
      %s112 = sphi 0, %s112
      %s114 = sphi 0, %s112
      %s115 = sphi 0, %s114
      %s129 = sphi 0, %s115
      %s135 = sphi 0, %s137
      %s138 = sphi 0, %s135
      %s139 = sphi 0, %s138
      %s155 = sphi 0, %s139
      %s161 = sphi 0, %s163
      %s164 = sphi 0, %s161
      %s165 = sphi 0, %s164
      %s181 = sphi 0, %s165
    $region4: #{tpu_custom_call.1} parent=1 // loop_header_branch
      %18 = sbr.rel (%p16) target = $region8
    $region5: #{tpu_custom_call.1} parent=1 // loop_body
      %s20 = ssub.s32 %s15, 1
      %s21 = ssub.s32 %s15, 2
      %s22 = sadd.s32 %s15, 1
      %s23 = ssub.s32 %s15, %s22
      %p24 = scmp.eq.s32.totalorder %s23, 0
      %s26 = sadd.s32 %s25, 1
      %s27 = scalar_select %p24, %s25, %s26
      %p30 = pneg %p24
      %p31 = scmp.eq.s32.totalorder %s15, 1
      %p32 = por %p30, %p31
      %p33 = scmp.ne.s32.totalorder %s25, %s28
      %p34 = scmp.eq.s32.totalorder %s15, 0
      %p35 = por %p33, %p34
      %p36 = scmp.ne.s32.totalorder %s25, %s28
      %p37 = scmp.eq.s32.totalorder %s20, 1
      %p38 = por %p36, %p37
      %p39 = scmp.ne.s32.totalorder %s28, %s29
      %p40 = scmp.eq.s32.totalorder %s20, 0
      %p41 = por %p39, %p40
      %p42 = scmp.ne.s32.totalorder %s28, %s29
      %p43 = scmp.eq.s32.totalorder %s21, 1
      %p44 = por %p42, %p43
      %p46 = scmp.ne.s32.totalorder %s29, %s45
      %p47 = scmp.eq.s32.totalorder %s21, 0
      %p48 = por %p46, %p47
      %s50 = sadd.s32 %s49, 1
      %p53 = scmp.eq.s32.totalorder %s15, 1
      %p54 = scmp.ne.s32.totalorder %s49, %s51
      %p55 = scmp.eq.s32.totalorder %s15, 0
      %p56 = por %p54, %p55
      %p57 = scmp.ne.s32.totalorder %s49, %s51
      %p58 = scmp.eq.s32.totalorder %s20, 1
      %p59 = por %p57, %p58
      %p60 = scmp.ne.s32.totalorder %s51, %s52
      %p61 = scmp.eq.s32.totalorder %s20, 0
      %p62 = por %p60, %p61
      %p63 = scmp.ne.s32.totalorder %s51, %s52
      %p64 = scmp.eq.s32.totalorder %s21, 1
      %p65 = por %p63, %p64
      %p67 = scmp.ne.s32.totalorder %s52, %s66
      %p68 = scmp.eq.s32.totalorder %s21, 0
      %p69 = por %p67, %p68
      %s71 = sadd.s32 %s70, 1
      %p74 = scmp.eq.s32.totalorder %s15, 1
      %p75 = scmp.ne.s32.totalorder %s70, %s72
      %p76 = scmp.eq.s32.totalorder %s15, 0
      %p77 = por %p75, %p76
      %p78 = scmp.ne.s32.totalorder %s70, %s72
      %p79 = scmp.eq.s32.totalorder %s20, 1
      %p80 = por %p78, %p79
      %p81 = scmp.ne.s32.totalorder %s72, %s73
      %p82 = scmp.eq.s32.totalorder %s20, 0
      %p83 = por %p81, %p82
      %p84 = scmp.ne.s32.totalorder %s72, %s73
      %p85 = scmp.eq.s32.totalorder %s21, 1
      %p86 = por %p84, %p85
      %p88 = scmp.ne.s32.totalorder %s73, %s87
      %p89 = scmp.eq.s32.totalorder %s21, 0
      %p90 = por %p88, %p89
      %s92 = sadd.s32 %s91, 1
      %p95 = scmp.eq.s32.totalorder %s15, 1
      %p96 = scmp.ne.s32.totalorder %s91, %s93
      %p97 = scmp.eq.s32.totalorder %s15, 0
      %p98 = por %p96, %p97
      %p99 = scmp.ne.s32.totalorder %s91, %s93
      %p100 = scmp.eq.s32.totalorder %s20, 1
      %p101 = por %p99, %p100
      %p102 = scmp.ne.s32.totalorder %s93, %s94
      %p103 = scmp.eq.s32.totalorder %s20, 0
      %p104 = por %p102, %p103
      %p105 = scmp.ne.s32.totalorder %s93, %s94
      %p106 = scmp.eq.s32.totalorder %s21, 1
      %p107 = por %p105, %p106
      %p109 = scmp.ne.s32.totalorder %s94, %s108
      %p110 = scmp.eq.s32.totalorder %s21, 0
      %p111 = por %p109, %p110
      %s113 = sadd.s32 %s112, 1
      %p116 = scmp.eq.s32.totalorder %s15, 1
      %p117 = scmp.ne.s32.totalorder %s112, %s114
      %p118 = scmp.eq.s32.totalorder %s15, 0
      %p119 = por %p117, %p118
      %p120 = scmp.ne.s32.totalorder %s112, %s114
      %p121 = scmp.eq.s32.totalorder %s20, 1
      %p122 = por %p120, %p121
      %p123 = scmp.ne.s32.totalorder %s114, %s115
      %p124 = scmp.eq.s32.totalorder %s20, 0
      %p125 = por %p123, %p124
      %p126 = scmp.ne.s32.totalorder %s114, %s115
      %p127 = scmp.eq.s32.totalorder %s21, 1
      %p128 = por %p126, %p127
      %p130 = scmp.ne.s32.totalorder %s115, %s129
      %p131 = scmp.eq.s32.totalorder %s21, 0
      %p132 = por %p130, %p131
      %s133 = ssub.s32 %s15, %s22
      %p134 = scmp.eq.s32.totalorder %s133, 0
      %s136 = sadd.s32 %s135, 1
      %s137 = scalar_select %p134, %s135, %s136
      %p140 = pneg %p134
      %p141 = scmp.eq.s32.totalorder %s15, 1
      %p142 = por %p140, %p141
      %p143 = scmp.ne.s32.totalorder %s135, %s138
      %p144 = scmp.eq.s32.totalorder %s15, 0
      %p145 = por %p143, %p144
      %p146 = scmp.ne.s32.totalorder %s135, %s138
      %p147 = scmp.eq.s32.totalorder %s20, 1
      %p148 = por %p146, %p147
      %p149 = scmp.ne.s32.totalorder %s138, %s139
      %p150 = scmp.eq.s32.totalorder %s20, 0
      %p151 = por %p149, %p150
      %p152 = scmp.ne.s32.totalorder %s138, %s139
      %p153 = scmp.eq.s32.totalorder %s21, 1
      %p154 = por %p152, %p153
      %p156 = scmp.ne.s32.totalorder %s139, %s155
      %p157 = scmp.eq.s32.totalorder %s21, 0
      %p158 = por %p156, %p157
      %s159 = ssub.s32 %s15, %s22
      %p160 = scmp.eq.s32.totalorder %s159, 0
      %s162 = sadd.s32 %s161, 1
      %s163 = scalar_select %p160, %s161, %s162
      %p166 = pneg %p160
      %p167 = scmp.eq.s32.totalorder %s15, 1
      %p168 = por %p166, %p167
      %p169 = scmp.ne.s32.totalorder %s161, %s164
      %p170 = scmp.eq.s32.totalorder %s15, 0
      %p171 = por %p169, %p170
      %p172 = scmp.ne.s32.totalorder %s161, %s164
      %p173 = scmp.eq.s32.totalorder %s20, 1
      %p174 = por %p172, %p173
      %p175 = scmp.ne.s32.totalorder %s164, %s165
      %p176 = scmp.eq.s32.totalorder %s20, 0
      %p177 = por %p175, %p176
      %p178 = scmp.ne.s32.totalorder %s164, %s165
      %p179 = scmp.eq.s32.totalorder %s21, 1
      %p180 = por %p178, %p179
      %p182 = scmp.ne.s32.totalorder %s165, %s181
      %p183 = scmp.eq.s32.totalorder %s21, 0
      %p184 = por %p182, %p183
      %p185 = scmp.le.s32.totalorder 1, %s15
      %p186 = scmp.lt.s32.totalorder %s15, 3
      %p187 = pnand %p185, %p186
      %p188 = pneg %p187
      // Predicated region
      $region9: #{tpu_custom_call.1} parent=5 // pred_check
        _
      $region10: #{tpu_custom_call.1} parent=5 // pred_check_branch
        %190 = sbr.rel (%p187) target = $region12
      $region11: #{tpu_custom_call.1} parent=5 // pred_region
        %s191 = ssub.s32 %s15, 1
        // Predicated region
        $region13: #{tpu_custom_call.1} parent=11 // pred_check
          %p192 = pneg %p62
        $region14: #{tpu_custom_call.1} parent=11 // pred_check_branch
          %194 = sbr.rel (%p192) target = $region16
        $region15: #{tpu_custom_call.1} parent=11 // pred_region
          _
        $region16: #{tpu_custom_call.1} parent=11 // pred_fallthru
          _
        // Predicated region
        $region17: #{tpu_custom_call.1} parent=11 // pred_check
          %p195 = pneg %p83
        $region18: #{tpu_custom_call.1} parent=11 // pred_check_branch
          %197 = sbr.rel (%p195) target = $region20
        $region19: #{tpu_custom_call.1} parent=11 // pred_region
          _
        $region20: #{tpu_custom_call.1} parent=11 // pred_fallthru
          _
        // Predicated region
        $region21: #{tpu_custom_call.1} parent=11 // pred_check
          %p198 = pneg %p104
        $region22: #{tpu_custom_call.1} parent=11 // pred_check_branch
          %200 = sbr.rel (%p198) target = $region24
        $region23: #{tpu_custom_call.1} parent=11 // pred_region
          _
        $region24: #{tpu_custom_call.1} parent=11 // pred_fallthru
          _
        // Predicated region
        $region25: #{tpu_custom_call.1} parent=11 // pred_check
          %p201 = pneg %p125
        $region26: #{tpu_custom_call.1} parent=11 // pred_check_branch
          %203 = sbr.rel (%p201) target = $region28
        $region27: #{tpu_custom_call.1} parent=11 // pred_region
          _
        $region28: #{tpu_custom_call.1} parent=11 // pred_fallthru
          _
      $region12: #{tpu_custom_call.1} parent=5 // pred_fallthru
        _
      %p204 = scmp.lt.s32.totalorder %s15, 2
      // Predicated region
      $region29: #{tpu_custom_call.1} parent=5 // pred_check
        %p205 = pneg %p204
      $region30: #{tpu_custom_call.1} parent=5 // pred_check_branch
        %207 = sbr.rel (%p205) target = $region32
      $region31: #{tpu_custom_call.1} parent=5 // pred_region
        // Predicated region
        $region33: #{tpu_custom_call.1} parent=31 // pred_check
          %p208 = pneg %p35
        $region34: #{tpu_custom_call.1} parent=31 // pred_check_branch
          %210 = sbr.rel (%p208) target = $region36
        $region35: #{tpu_custom_call.1} parent=31 // pred_region
          %p211 = scmp.lt.s32.totalorder %s15, 1
          %s212 = scalar_select %p211, %s15, 1
          %s213 = smul.addr %s212, 3
          %s214 = smul.addr %s213, 4
          %s215 = scalar_lea.vmem %s0, %s214
        $region36: #{tpu_custom_call.1} parent=31 // pred_fallthru
          _
        // Predicated region
        $region37: #{tpu_custom_call.1} parent=31 // pred_check
          %p216 = pneg %p145
        $region38: #{tpu_custom_call.1} parent=31 // pred_check_branch
          %218 = sbr.rel (%p216) target = $region40
        $region39: #{tpu_custom_call.1} parent=31 // pred_region
          %p219 = scmp.lt.s32.totalorder %s15, 1
          %s220 = scalar_select %p219, %s15, 1
          %s221 = smul.addr %s220, 2
          %s222 = smul.addr %s221, 8
          %s223 = scalar_lea.vmem %s5, %s222
        $region40: #{tpu_custom_call.1} parent=31 // pred_fallthru
          _
      $region32: #{tpu_custom_call.1} parent=5 // pred_fallthru
        _
      %p224 = scmp.le.s32.totalorder 1, %s15
      %p225 = scmp.lt.s32.totalorder %s15, 3
      %p226 = pnand %p224, %p225
      %p227 = pneg %p226
      // Predicated region
      $region41: #{tpu_custom_call.1} parent=5 // pred_check
        _
      $region42: #{tpu_custom_call.1} parent=5 // pred_check_branch
        %229 = sbr.rel (%p226) target = $region44
      $region43: #{tpu_custom_call.1} parent=5 // pred_region
        %s230 = ssub.s32 %s15, 1
        %p231 = scmp.lt.s32.totalorder %s20, 1
        %s232 = scalar_select %p231, %s20, 1
        %s233 = smul.addr %s232, 3
        %s234 = smul.addr %s233, 4
        %s235 = scalar_lea.vmem %s0, %s234
        %p236 = pneg %p41
        %p237 = pneg %p38
        %p238 = pneg %p62
        %p239 = pneg %p59
        %p240 = pneg %p83
        %p241 = pneg %p80
        %p242 = pneg %p104
        %p243 = pneg %p101
        %p244 = pneg %p125
        %p245 = pneg %p122
        %p246 = scmp.lt.s32.totalorder %s20, 1
        %s247 = scalar_select %p246, %s20, 1
        %s248 = smul.addr %s247, 2
        %s249 = smul.addr %s248, 8
        %s250 = scalar_lea.vmem %s5, %s249
        %p251 = pneg %p151
        %p252 = pneg %p148
        %p253 = pneg %p177
        %p254 = pneg %p174
        %s255 = sand.u32 %s164, 1
        %s256 = scalar_lea.sflag [#allocation3], %s255
        %s257 = sand.u32 %s164, 1
        %s258 = smul.addr %s257, 16
        %s259 = scalar_lea.vmem [#allocation2], %s258
        %p260 = scmp.lt.s32.totalorder %s20, 1
        %s261 = scalar_select %p260, %s20, 1
        %s262 = smul.addr %s261, 3
        %s263 = smul.addr %s262, 4
        %s264 = scalar_lea.vmem %s0, %s263
        %p265 = scmp.lt.s32.totalorder %s20, 1
        %s266 = scalar_select %p265, %s20, 1
        %s267 = smul.addr %s266, 2
        %s268 = smul.addr %s267, 8
        %s269 = scalar_lea.vmem %s5, %s268
        %v271 = vld [vmem:[%s264] sm:$0xf]
        %v272 = vld [vmem:[%s264 + $0x4] sm:$0xf]
        %v273 = vld [vmem:[%s264 + $0x8] sm:$0x1]
        %v274 = vld [vmem:[%s1] sm:$0xff]
        %v275 = vld [vmem:[%s1 + $0x8] sm:$0xff]
        %v276 = vld [vmem:[%s1 + $0x10] sm:$0xff]
        %v277 = vld [vmem:[%s1 + $0x18] sm:$0xff]
        %v278 = vld [vmem:[%s1 + $0x20] sm:$0xff]
        %v279 = vld [vmem:[%s1 + $0x28] sm:$0xff]
        %v280 = vld [vmem:[%s1 + $0x30] sm:$0xff]
        %v281 = vld [vmem:[%s1 + $0x38] sm:$0xff]
        %v282 = vld [vmem:[%s1 + $0x40] sm:$0xff]
        %v283 = vld [vmem:[%s1 + $0x48] sm:$0xff]
        %v284 = vld [vmem:[%s264 + $0x8] sm:$0x3]
        %s285 = scalar_lea.vmem %s1, 80
        %v286 = vld [vmem:[%s285] sm:$0xff]
        %v287 = vld [vmem:[%s285 + $0x8] sm:$0xff]
        %v288 = vld [vmem:[%s285 + $0x10] sm:$0xff]
        %v289 = vld [vmem:[%s285 + $0x18] sm:$0xff]
        %v290 = vld [vmem:[%s285 + $0x20] sm:$0xff]
        %v291 = vld [vmem:[%s285 + $0x28] sm:$0xff]
        %v292 = vld [vmem:[%s285 + $0x30] sm:$0xff]
        %v293 = vld [vmem:[%s285 + $0x38] sm:$0xff]
        %v294 = vld [vmem:[%s285 + $0x40] sm:$0xff]
        %v295 = vld [vmem:[%s285 + $0x48] sm:$0xff]
        %v299 = vunpack.c.l.b16 %v271
        %v300 = vunpack.c.l.b16 %v272
        %v301 = vunpack.c.l.b16 %v284
        %v302 = vpack.c.b16 %v300, %v299
        %v303 = vpack.c.b16 %v301, %v301
        %vm304 = vsmask.f32 7424
        %v306 = vshrl.u32 %v302, 16
        %v308 = vshll.u32 %v302, 16
        %v310 = vrot.slane %v308, 1
        %v311 = vor.u32 %v306, %v310
        %v313 = vshll.u32 %v303, 16
        %v315 = vrot.slane %v313, 1
        %v316 = vsel %vm304, %v311, %v315
        %v317 = vshrl.u32 %v303, 16
        %v319 = vor.u32 %v317, %v315
        %v330 = vunpack.c.l.b16 %v286
        %v331 = vunpack.c.h.b16 %v286
        %v332 = vunpack.c.l.b16 %v287
        %v333 = vunpack.c.h.b16 %v287
        %v334 = vunpack.c.l.b16 %v288
        %v335 = vunpack.c.h.b16 %v288
        %v336 = vunpack.c.l.b16 %v289
        %v337 = vunpack.c.h.b16 %v289
        %v338 = vunpack.c.l.b16 %v290
        %v339 = vunpack.c.h.b16 %v290
        %v340 = vunpack.c.l.b16 %v291
        %v341 = vunpack.c.h.b16 %v291
        %v342 = vunpack.c.l.b16 %v292
        %v343 = vunpack.c.h.b16 %v292
        %v344 = vunpack.c.l.b16 %v293
        %v345 = vunpack.c.h.b16 %v293
        %v346 = vunpack.c.l.b16 %v294
        %v347 = vunpack.c.h.b16 %v294
        %v348 = vunpack.c.l.b16 %v295
        %v349 = vunpack.c.h.b16 %v295
        %v350 = vpack.c.b16 %v332, %v330
        %v351 = vpack.c.b16 %v333, %v331
        %v352 = vpack.c.b16 %v336, %v334
        %v353 = vpack.c.b16 %v337, %v335
        %v354 = vpack.c.b16 %v340, %v338
        %v355 = vpack.c.b16 %v341, %v339
        %v356 = vpack.c.b16 %v344, %v342
        %v357 = vpack.c.b16 %v345, %v343
        %v358 = vpack.c.b16 %v348, %v346
        %v359 = vpack.c.b16 %v349, %v347
        %vm370 = vcmask 654336
        %v372 = vsel %vm370, %v316, 0
        %v375 = vsel %vm370, %v319, 0
        %377 = vmatprep.subr.bf16.mxu0 %v351
        %378 = vmatpush1.bf16.msra.mxu0 %v350
        %379 = vmatprep.subr.bf16.mxu0 %v353
        %380 = vmatpush1.bf16.msra.mxu0 %v352
        %381 = vmatprep.subr.bf16.mxu0 %v355
        %382 = vmatpush1.bf16.msra.mxu0 %v354
        %383 = vmatprep.subr.bf16.mxu0 %v357
        %384 = vmatpush1.bf16.msra.mxu0 %v356
        %385 = vmatprep.subr.bf16.mxu0 %v359
        %386 = vmatpush1.bf16.msra.mxu0 %v358
        %387 = vmatprep.subr.bf16.mxu0 0
        %388 = vmatpush1.bf16.msra.mxu0 0
        %389 = vmatprep.subr.bf16.mxu0 0
        %390 = vmatpush1.bf16.msra.mxu0 0
        %391 = vmatprep.subr.bf16.mxu0 0
        %392 = vmatpush1.bf16.msra.mxu0 0
        %393 = vmatprep.subr.bf16.mxu0 0
        %394 = vmatpush1.bf16.msra.mxu0 0
        %395 = vmatprep.subr.bf16.mxu0 0
        %396 = vmatpush1.bf16.msra.mxu0 0
        %397 = vmatprep.subr.bf16.mxu0 0
        %398 = vmatpush1.bf16.msra.mxu0 0
        %399 = vmatprep.subr.bf16.mxu0 0
        %400 = vmatpush1.bf16.msra.mxu0 0
        %401 = vmatprep.subr.bf16.mxu0 0
        %402 = vmatpush1.bf16.msra.mxu0 0
        %403 = vmatprep.subr.bf16.mxu0 0
        %404 = vmatpush1.bf16.msra.mxu0 0
        %405 = vmatprep.subr.bf16.mxu0 0
        %406 = vmatpush1.bf16.msra.mxu0 0
        %407 = vmatprep.subr.bf16.mxu0 0
        %408 = vmatpush1.bf16.msra.mxu0 0
        %409 = vmatprep.mubr.bf16.mxu0 0
        %410 = vmatmul.mubr.bf16.gmra.mrb[0].mxu0 %v372
        %v411 = vpop.f32.mrb[0].mxu0
        %v412 = vadd.f32 0.0, %v411
        %v413 = vpop.f32.mrb[0].mxu0
        %v414 = vadd.f32 0.0, %v413
        %v415 = vpop.f32.mrb[0].mxu0
        %v416 = vadd.f32 0.0, %v415
        %v417 = vpop.f32.mrb[0].mxu0
        %v418 = vadd.f32 0.0, %v417
        %419 = vmatprep.mubr.bf16.mxu0 0
        %420 = vmatmul.mubr.bf16.gmra.mrb[0].mxu0 %v375
        %v421 = vpop.f32.mrb[0].mxu0
        %v422 = vadd.f32 0.0, %v421
        %v423 = vpop.f32.mrb[0].mxu0
        %v424 = vadd.f32 0.0, %v423
        %v425 = vpop.f32.mrb[0].mxu0
        %v426 = vpop.f32.mrb[0].mxu0
        %427 = vdwg.mxu0
        %v429 = vunpack.c.l.b16 %v273
        %v430 = vpack.c.b16 %v429, %v429
        %v441 = vunpack.c.l.b16 %v274
        %v442 = vunpack.c.h.b16 %v274
        %v443 = vunpack.c.l.b16 %v275
        %v444 = vunpack.c.h.b16 %v275
        %v445 = vunpack.c.l.b16 %v276
        %v446 = vunpack.c.h.b16 %v276
        %v447 = vunpack.c.l.b16 %v277
        %v448 = vunpack.c.h.b16 %v277
        %v449 = vunpack.c.l.b16 %v278
        %v450 = vunpack.c.h.b16 %v278
        %v451 = vunpack.c.l.b16 %v279
        %v452 = vunpack.c.h.b16 %v279
        %v453 = vunpack.c.l.b16 %v280
        %v454 = vunpack.c.h.b16 %v280
        %v455 = vunpack.c.l.b16 %v281
        %v456 = vunpack.c.h.b16 %v281
        %v457 = vunpack.c.l.b16 %v282
        %v458 = vunpack.c.h.b16 %v282
        %v459 = vunpack.c.l.b16 %v283
        %v460 = vunpack.c.h.b16 %v283
        %v461 = vpack.c.b16 %v443, %v441
        %v462 = vpack.c.b16 %v444, %v442
        %v463 = vpack.c.b16 %v447, %v445
        %v464 = vpack.c.b16 %v448, %v446
        %v465 = vpack.c.b16 %v451, %v449
        %v466 = vpack.c.b16 %v452, %v450
        %v467 = vpack.c.b16 %v455, %v453
        %v468 = vpack.c.b16 %v456, %v454
        %v469 = vpack.c.b16 %v459, %v457
        %v470 = vpack.c.b16 %v460, %v458
        %v481 = vsel %vm370, %v302, 0
        %v484 = vsel %vm370, %v430, 0
        %486 = vmatprep.subr.bf16.mxu0 %v462
        %487 = vmatpush1.bf16.msra.mxu0 %v461
        %488 = vmatprep.subr.bf16.mxu0 %v464
        %489 = vmatpush1.bf16.msra.mxu0 %v463
        %490 = vmatprep.subr.bf16.mxu0 %v466
        %491 = vmatpush1.bf16.msra.mxu0 %v465
        %492 = vmatprep.subr.bf16.mxu0 %v468
        %493 = vmatpush1.bf16.msra.mxu0 %v467
        %494 = vmatprep.subr.bf16.mxu0 %v470
        %495 = vmatpush1.bf16.msra.mxu0 %v469
        %496 = vmatprep.subr.bf16.mxu0 0
        %497 = vmatpush1.bf16.msra.mxu0 0
        %498 = vmatprep.subr.bf16.mxu0 0
        %499 = vmatpush1.bf16.msra.mxu0 0
        %500 = vmatprep.subr.bf16.mxu0 0
        %501 = vmatpush1.bf16.msra.mxu0 0
        %502 = vmatprep.subr.bf16.mxu0 0
        %503 = vmatpush1.bf16.msra.mxu0 0
        %504 = vmatprep.subr.bf16.mxu0 0
        %505 = vmatpush1.bf16.msra.mxu0 0
        %506 = vmatprep.subr.bf16.mxu0 0
        %507 = vmatpush1.bf16.msra.mxu0 0
        %508 = vmatprep.subr.bf16.mxu0 0
        %509 = vmatpush1.bf16.msra.mxu0 0
        %510 = vmatprep.subr.bf16.mxu0 0
        %511 = vmatpush1.bf16.msra.mxu0 0
        %512 = vmatprep.subr.bf16.mxu0 0
        %513 = vmatpush1.bf16.msra.mxu0 0
        %514 = vmatprep.subr.bf16.mxu0 0
        %515 = vmatpush1.bf16.msra.mxu0 0
        %516 = vmatprep.subr.bf16.mxu0 0
        %517 = vmatpush1.bf16.msra.mxu0 0
        %518 = vmatprep.mubr.bf16.mxu0 0
        %519 = vmatmul.mubr.bf16.gmra.mrb[0].mxu0 %v481
        %v520 = vpop.f32.mrb[0].mxu0
        %v521 = vadd.f32 %v412, %v520
        %v522 = vpop.f32.mrb[0].mxu0
        %v523 = vadd.f32 %v414, %v522
        %v524 = vpop.f32.mrb[0].mxu0
        %v525 = vadd.f32 %v416, %v524
        %v526 = vpop.f32.mrb[0].mxu0
        %v527 = vadd.f32 %v418, %v526
        %528 = vmatprep.mubr.bf16.mxu0 0
        %529 = vmatmul.mubr.bf16.gmra.mrb[0].mxu0 %v484
        %v530 = vpop.f32.mrb[0].mxu0
        %v531 = vadd.f32 %v422, %v530
        %v532 = vpop.f32.mrb[0].mxu0
        %v533 = vadd.f32 %v424, %v532
        %v534 = vpop.f32.mrb[0].mxu0
        %v535 = vpop.f32.mrb[0].mxu0
        %536 = vdwg.mxu0
        %v537 = vld [vmem:[%s264] sm:$0xe]
        %s538 = scalar_lea.vmem %s1, 160
        %v539 = vld [vmem:[%s538] sm:$0xff]
        %v540 = vld [vmem:[%s538 + $0x8] sm:$0xff]
        %v541 = vld [vmem:[%s538 + $0x10] sm:$0xff]
        %v542 = vld [vmem:[%s538 + $0x18] sm:$0xff]
        %v543 = vld [vmem:[%s538 + $0x20] sm:$0xff]
        %v544 = vld [vmem:[%s538 + $0x28] sm:$0xff]
        %v545 = vld [vmem:[%s538 + $0x30] sm:$0xff]
        %v546 = vld [vmem:[%s538 + $0x38] sm:$0xff]
        %v547 = vld [vmem:[%s538 + $0x40] sm:$0xff]
        %v548 = vld [vmem:[%s538 + $0x48] sm:$0xff]
        %v550 = vunpack.c.l.b16 %v537
        %v551 = vpack.c.b16 %v300, %v550
        %vm552 = vcmask 1046528
        %v553 = vrot.slane %v551, 1
        %v554 = vrot.slane %v303, 1
        %v555 = vsel %vm552, %v553, %v554
        %v566 = vunpack.c.l.b16 %v539
        %v567 = vunpack.c.h.b16 %v539
        %v568 = vunpack.c.l.b16 %v540
        %v569 = vunpack.c.h.b16 %v540
        %v570 = vunpack.c.l.b16 %v541
        %v571 = vunpack.c.h.b16 %v541
        %v572 = vunpack.c.l.b16 %v542
        %v573 = vunpack.c.h.b16 %v542
        %v574 = vunpack.c.l.b16 %v543
        %v575 = vunpack.c.h.b16 %v543
        %v576 = vunpack.c.l.b16 %v544
        %v577 = vunpack.c.h.b16 %v544
        %v578 = vunpack.c.l.b16 %v545
        %v579 = vunpack.c.h.b16 %v545
        %v580 = vunpack.c.l.b16 %v546
        %v581 = vunpack.c.h.b16 %v546
        %v582 = vunpack.c.l.b16 %v547
        %v583 = vunpack.c.h.b16 %v547
        %v584 = vunpack.c.l.b16 %v548
        %v585 = vunpack.c.h.b16 %v548
        %v586 = vpack.c.b16 %v568, %v566
        %v587 = vpack.c.b16 %v569, %v567
        %v588 = vpack.c.b16 %v572, %v570
        %v589 = vpack.c.b16 %v573, %v571
        %v590 = vpack.c.b16 %v576, %v574
        %v591 = vpack.c.b16 %v577, %v575
        %v592 = vpack.c.b16 %v580, %v578
        %v593 = vpack.c.b16 %v581, %v579
        %v594 = vpack.c.b16 %v584, %v582
        %v595 = vpack.c.b16 %v585, %v583
        %v607 = vsel %vm370, %v555, 0
        %v610 = vsel %vm370, %v554, 0
        %612 = vmatprep.subr.bf16.mxu0 %v587
        %613 = vmatpush1.bf16.msra.mxu0 %v586
        %614 = vmatprep.subr.bf16.mxu0 %v589
        %615 = vmatpush1.bf16.msra.mxu0 %v588
        %616 = vmatprep.subr.bf16.mxu0 %v591
        %617 = vmatpush1.bf16.msra.mxu0 %v590
        %618 = vmatprep.subr.bf16.mxu0 %v593
        %619 = vmatpush1.bf16.msra.mxu0 %v592
        %620 = vmatprep.subr.bf16.mxu0 %v595
        %621 = vmatpush1.bf16.msra.mxu0 %v594
        %622 = vmatprep.subr.bf16.mxu0 0
        %623 = vmatpush1.bf16.msra.mxu0 0
        %624 = vmatprep.subr.bf16.mxu0 0
        %625 = vmatpush1.bf16.msra.mxu0 0
        %626 = vmatprep.subr.bf16.mxu0 0
        %627 = vmatpush1.bf16.msra.mxu0 0
        %628 = vmatprep.subr.bf16.mxu0 0
        %629 = vmatpush1.bf16.msra.mxu0 0
        %630 = vmatprep.subr.bf16.mxu0 0
        %631 = vmatpush1.bf16.msra.mxu0 0
        %632 = vmatprep.subr.bf16.mxu0 0
        %633 = vmatpush1.bf16.msra.mxu0 0
        %634 = vmatprep.subr.bf16.mxu0 0
        %635 = vmatpush1.bf16.msra.mxu0 0
        %636 = vmatprep.subr.bf16.mxu0 0
        %637 = vmatpush1.bf16.msra.mxu0 0
        %638 = vmatprep.subr.bf16.mxu0 0
        %639 = vmatpush1.bf16.msra.mxu0 0
        %640 = vmatprep.subr.bf16.mxu0 0
        %641 = vmatpush1.bf16.msra.mxu0 0
        %642 = vmatprep.subr.bf16.mxu0 0
        %643 = vmatpush1.bf16.msra.mxu0 0
        %644 = vmatprep.mubr.bf16.mxu0 0
        %645 = vmatmul.mubr.bf16.gmra.mrb[0].mxu0 %v607
        %v646 = vpop.f32.mrb[0].mxu0
        %v647 = vadd.f32 0.0, %v646
        %v648 = vpop.f32.mrb[0].mxu0
        %v649 = vadd.f32 0.0, %v648
        %v650 = vpop.f32.mrb[0].mxu0
        %v651 = vadd.f32 0.0, %v650
        %v652 = vpop.f32.mrb[0].mxu0
        %v653 = vadd.f32 0.0, %v652
        %654 = vmatprep.mubr.bf16.mxu0 0
        %655 = vmatmul.mubr.bf16.gmra.mrb[0].mxu0 %v610
        %v656 = vpop.f32.mrb[0].mxu0
        %v657 = vadd.f32 0.0, %v656
        %v658 = vpop.f32.mrb[0].mxu0
        %v659 = vadd.f32 0.0, %v658
        %v660 = vpop.f32.mrb[0].mxu0
        %v661 = vpop.f32.mrb[0].mxu0
        %662 = vdwg.mxu0
        %v663 = vadd.f32 %v521, %v647
        %v664 = vadd.f32 %v523, %v649
        %v665 = vadd.f32 %v525, %v651
        %v666 = vadd.f32 %v527, %v653
        %v667 = vadd.f32 %v531, %v657
        %v668 = vadd.f32 %v533, %v659
        %v669 = vld [vmem:[%s2] sm:$0xff]
        %v670 = vld [vmem:[%s2 + $0x8] sm:$0xff]
        %v671 = vld [vmem:[%s2 + $0x10] sm:$0xff]
        %v672 = vld [vmem:[%s2 + $0x18] sm:$0xff]
        %v673 = vld [vmem:[%s2 + $0x20] sm:$0x3]
        %v674 = vld [vmem:[%s2 + $0x28] sm:$0x3]
        %v675 = vmul.f32 %v663, %v669
        %v676 = vmul.f32 %v664, %v670
        %v677 = vmul.f32 %v665, %v671
        %v678 = vmul.f32 %v666, %v672
        %v679 = vmul.f32 %v667, %v673
        %v680 = vmul.f32 %v668, %v674
        %v681 = vld [vmem:[%s3] sm:$0xff]
        %v682 = vld [vmem:[%s3 + $0x8] sm:$0xff]
        %v683 = vld [vmem:[%s3 + $0x10] sm:$0xff]
        %v684 = vld [vmem:[%s3 + $0x18] sm:$0xff]
        %v685 = vld [vmem:[%s3 + $0x20] sm:$0x3]
        %v686 = vld [vmem:[%s3 + $0x28] sm:$0x3]
        %v687 = vadd.f32 %v675, %v681
        %v688 = vadd.f32 %v676, %v682
        %v689 = vadd.f32 %v677, %v683
        %v690 = vadd.f32 %v678, %v684
        %v691 = vadd.f32 %v679, %v685
        %v692 = vadd.f32 %v680, %v686
        %v693 = vmax.f32 %v687, 0.0
        %v694 = vmax.f32 %v688, 0.0
        %v695 = vmax.f32 %v689, 0.0
        %v696 = vmax.f32 %v690, 0.0
        %v697 = vmax.f32 %v691, 0.0
        %v698 = vmax.f32 %v692, 0.0
        %v699 = vpack.c.bf16 %v695, %v693
        %v700 = vpack.c.bf16 %v696, %v694
        %v701 = vpack.c.bf16 %v697, %v697
        %v702 = vpack.c.bf16 %v698, %v698
        %v703 = vld [vmem:[%s4] sm:$0xf]
        %v704 = vld [vmem:[%s4 + $0x4] sm:$0xf]
        %v705 = vld [vmem:[%s4 + $0x8] sm:$0xf]
        %v706 = vld [vmem:[%s4 + $0xc] sm:$0xf]
        %v707 = vld [vmem:[%s4 + $0x10] sm:$0xf]
        %v708 = vld [vmem:[%s4 + $0x14] sm:$0xf]
        %v709 = vld [vmem:[%s4 + $0x18] sm:$0xf]
        %v710 = vld [vmem:[%s4 + $0x1c] sm:$0xf]
        %v711 = vld [vmem:[%s4 + $0x20] sm:$0xf]
        %v712 = vld [vmem:[%s4 + $0x24] sm:$0xf]
        %v713 = vld [vmem:[%s4 + $0x28] sm:$0xf]
        %v714 = vld [vmem:[%s4 + $0x2c] sm:$0xf]
        %v715 = vld [vmem:[%s4 + $0x30] sm:$0xf]
        %v716 = vld [vmem:[%s4 + $0x34] sm:$0xf]
        %v717 = vld [vmem:[%s4 + $0x38] sm:$0xf]
        %v718 = vld [vmem:[%s4 + $0x3c] sm:$0xf]
        %v719 = vld [vmem:[%s4 + $0x40] sm:$0xf]
        %v720 = vld [vmem:[%s4 + $0x44] sm:$0xf]
        %s721 = scalar_lea.vmem %s4, 72
        %v722 = vld [vmem:[%s721] sm:$0xf]
        %v723 = vld [vmem:[%s721 + $0x4] sm:$0xf]
        %v724 = vld [vmem:[%s721 + $0x8] sm:$0xf]
        %v725 = vld [vmem:[%s721 + $0xc] sm:$0xf]
        %v726 = vld [vmem:[%s721 + $0x10] sm:$0xf]
        %v727 = vld [vmem:[%s721 + $0x14] sm:$0xf]
        %v728 = vld [vmem:[%s721 + $0x18] sm:$0xf]
        %v729 = vld [vmem:[%s721 + $0x1c] sm:$0xf]
        %v730 = vld [vmem:[%s721 + $0x20] sm:$0xf]
        %v731 = vld [vmem:[%s721 + $0x24] sm:$0xf]
        %v732 = vld [vmem:[%s721 + $0x28] sm:$0xf]
        %v733 = vld [vmem:[%s721 + $0x2c] sm:$0xf]
        %v734 = vld [vmem:[%s721 + $0x30] sm:$0xf]
        %v735 = vld [vmem:[%s721 + $0x34] sm:$0xf]
        %v736 = vld [vmem:[%s721 + $0x38] sm:$0xf]
        %v737 = vld [vmem:[%s721 + $0x3c] sm:$0xf]
        %v738 = vld [vmem:[%s721 + $0x40] sm:$0xf]
        %v739 = vld [vmem:[%s721 + $0x44] sm:$0xf]
        %v741 = vshrl.u32 %v699, 16
        %v743 = vshll.u32 %v699, 16
        %v745 = vrot.slane %v743, 1
        %v746 = vor.u32 %v741, %v745
        %v748 = vshll.u32 %v701, 16
        %v750 = vrot.slane %v748, 1
        %v751 = vsel %vm304, %v746, %v750
        %v753 = vshrl.u32 %v700, 16
        %v755 = vshll.u32 %v700, 16
        %v757 = vrot.slane %v755, 1
        %v758 = vor.u32 %v753, %v757
        %v760 = vshll.u32 %v702, 16
        %v762 = vrot.slane %v760, 1
        %v763 = vsel %vm304, %v758, %v762
        %v783 = vunpack.c.l.b16 %v722
        %v784 = vunpack.c.l.b16 %v723
        %v785 = vunpack.c.l.b16 %v724
        %v786 = vunpack.c.l.b16 %v725
        %v787 = vunpack.c.l.b16 %v726
        %v788 = vunpack.c.l.b16 %v727
        %v789 = vunpack.c.l.b16 %v728
        %v790 = vunpack.c.l.b16 %v729
        %v791 = vunpack.c.l.b16 %v730
        %v792 = vunpack.c.l.b16 %v731
        %v793 = vunpack.c.l.b16 %v732
        %v794 = vunpack.c.l.b16 %v733
        %v795 = vunpack.c.l.b16 %v734
        %v796 = vunpack.c.l.b16 %v735
        %v797 = vunpack.c.l.b16 %v736
        %v798 = vunpack.c.l.b16 %v737
        %v799 = vunpack.c.l.b16 %v738
        %v800 = vunpack.c.l.b16 %v739
        %v801 = vpack.c.b16 %v784, %v783
        %v802 = vpack.c.b16 %v786, %v785
        %v803 = vpack.c.b16 %v788, %v787
        %v804 = vpack.c.b16 %v790, %v789
        %v805 = vpack.c.b16 %v792, %v791
        %v806 = vpack.c.b16 %v794, %v793
        %v807 = vpack.c.b16 %v796, %v795
        %v808 = vpack.c.b16 %v798, %v797
        %v809 = vpack.c.b16 %v800, %v799
        %vm819 = vcmask 130048
        %v821 = vsel %vm819, %v763, 0
        %823 = vmatprep.subr.bf16.mxu0 0
        %824 = vmatpush1.bf16.msra.mxu0 %v801
        %825 = vmatprep.subr.bf16.mxu0 0
        %826 = vmatpush1.bf16.msra.mxu0 %v802
        %827 = vmatprep.subr.bf16.mxu0 0
        %828 = vmatpush1.bf16.msra.mxu0 %v803
        %829 = vmatprep.subr.bf16.mxu0 0
        %830 = vmatpush1.bf16.msra.mxu0 %v804
        %831 = vmatprep.subr.bf16.mxu0 0
        %832 = vmatpush1.bf16.msra.mxu0 %v805
        %833 = vmatprep.subr.bf16.mxu0 0
        %834 = vmatpush1.bf16.msra.mxu0 %v806
        %835 = vmatprep.subr.bf16.mxu0 0
        %836 = vmatpush1.bf16.msra.mxu0 %v807
        %837 = vmatprep.subr.bf16.mxu0 0
        %838 = vmatpush1.bf16.msra.mxu0 %v808
        %839 = vmatprep.subr.bf16.mxu0 0
        %840 = vmatpush1.bf16.msra.mxu0 %v809
        %841 = vmatprep.subr.bf16.mxu0 0
        %842 = vmatpush1.bf16.msra.mxu0 0
        %843 = vmatprep.subr.bf16.mxu0 0
        %844 = vmatpush1.bf16.msra.mxu0 0
        %845 = vmatprep.subr.bf16.mxu0 0
        %846 = vmatpush1.bf16.msra.mxu0 0
        %847 = vmatprep.subr.bf16.mxu0 0
        %848 = vmatpush1.bf16.msra.mxu0 0
        %849 = vmatprep.subr.bf16.mxu0 0
        %850 = vmatpush1.bf16.msra.mxu0 0
        %851 = vmatprep.subr.bf16.mxu0 0
        %852 = vmatpush1.bf16.msra.mxu0 0
        %853 = vmatprep.subr.bf16.mxu0 0
        %854 = vmatpush1.bf16.msra.mxu0 0
        %855 = vmatprep.mubr.bf16.mxu0 %v821
        %856 = vmatmul.mubr.bf16.gmra.mrb[0].mxu0 %v751
        %v857 = vpop.f32.mrb[0].mxu0
        %v858 = vadd.f32 0.0, %v857
        %v859 = vpop.f32.mrb[0].mxu0
        %v860 = vpop.f32.mrb[0].mxu0
        %v861 = vadd.f32 0.0, %v860
        %v862 = vpop.f32.mrb[0].mxu0
        %863 = vdwg.mxu0
        %v882 = vunpack.c.l.b16 %v703
        %v883 = vunpack.c.l.b16 %v704
        %v884 = vunpack.c.l.b16 %v705
        %v885 = vunpack.c.l.b16 %v706
        %v886 = vunpack.c.l.b16 %v707
        %v887 = vunpack.c.l.b16 %v708
        %v888 = vunpack.c.l.b16 %v709
        %v889 = vunpack.c.l.b16 %v710
        %v890 = vunpack.c.l.b16 %v711
        %v891 = vunpack.c.l.b16 %v712
        %v892 = vunpack.c.l.b16 %v713
        %v893 = vunpack.c.l.b16 %v714
        %v894 = vunpack.c.l.b16 %v715
        %v895 = vunpack.c.l.b16 %v716
        %v896 = vunpack.c.l.b16 %v717
        %v897 = vunpack.c.l.b16 %v718
        %v898 = vunpack.c.l.b16 %v719
        %v899 = vunpack.c.l.b16 %v720
        %v900 = vpack.c.b16 %v883, %v882
        %v901 = vpack.c.b16 %v885, %v884
        %v902 = vpack.c.b16 %v887, %v886
        %v903 = vpack.c.b16 %v889, %v888
        %v904 = vpack.c.b16 %v891, %v890
        %v905 = vpack.c.b16 %v893, %v892
        %v906 = vpack.c.b16 %v895, %v894
        %v907 = vpack.c.b16 %v897, %v896
        %v908 = vpack.c.b16 %v899, %v898
        %v918 = vsel %vm819, %v700, 0
        %920 = vmatprep.subr.bf16.mxu0 0
        %921 = vmatpush1.bf16.msra.mxu0 %v900
        %922 = vmatprep.subr.bf16.mxu0 0
        %923 = vmatpush1.bf16.msra.mxu0 %v901
        %924 = vmatprep.subr.bf16.mxu0 0
        %925 = vmatpush1.bf16.msra.mxu0 %v902
        %926 = vmatprep.subr.bf16.mxu0 0
        %927 = vmatpush1.bf16.msra.mxu0 %v903
        %928 = vmatprep.subr.bf16.mxu0 0
        %929 = vmatpush1.bf16.msra.mxu0 %v904
        %930 = vmatprep.subr.bf16.mxu0 0
        %931 = vmatpush1.bf16.msra.mxu0 %v905
        %932 = vmatprep.subr.bf16.mxu0 0
        %933 = vmatpush1.bf16.msra.mxu0 %v906
        %934 = vmatprep.subr.bf16.mxu0 0
        %935 = vmatpush1.bf16.msra.mxu0 %v907
        %936 = vmatprep.subr.bf16.mxu0 0
        %937 = vmatpush1.bf16.msra.mxu0 %v908
        %938 = vmatprep.subr.bf16.mxu0 0
        %939 = vmatpush1.bf16.msra.mxu0 0
        %940 = vmatprep.subr.bf16.mxu0 0
        %941 = vmatpush1.bf16.msra.mxu0 0
        %942 = vmatprep.subr.bf16.mxu0 0
        %943 = vmatpush1.bf16.msra.mxu0 0
        %944 = vmatprep.subr.bf16.mxu0 0
        %945 = vmatpush1.bf16.msra.mxu0 0
        %946 = vmatprep.subr.bf16.mxu0 0
        %947 = vmatpush1.bf16.msra.mxu0 0
        %948 = vmatprep.subr.bf16.mxu0 0
        %949 = vmatpush1.bf16.msra.mxu0 0
        %950 = vmatprep.subr.bf16.mxu0 0
        %951 = vmatpush1.bf16.msra.mxu0 0
        %952 = vmatprep.mubr.bf16.mxu0 %v918
        %953 = vmatmul.mubr.bf16.gmra.mrb[0].mxu0 %v699
        %v954 = vpop.f32.mrb[0].mxu0
        %v955 = vadd.f32 %v858, %v954
        %v956 = vpop.f32.mrb[0].mxu0
        %v957 = vpop.f32.mrb[0].mxu0
        %v958 = vadd.f32 %v861, %v957
        %v959 = vpop.f32.mrb[0].mxu0
        %960 = vdwg.mxu0
        %s961 = scalar_lea.vmem %s4, 144
        %v962 = vld [vmem:[%s961] sm:$0xf]
        %v963 = vld [vmem:[%s961 + $0x4] sm:$0xf]
        %v964 = vld [vmem:[%s961 + $0x8] sm:$0xf]
        %v965 = vld [vmem:[%s961 + $0xc] sm:$0xf]
        %v966 = vld [vmem:[%s961 + $0x10] sm:$0xf]
        %v967 = vld [vmem:[%s961 + $0x14] sm:$0xf]
        %v968 = vld [vmem:[%s961 + $0x18] sm:$0xf]
        %v969 = vld [vmem:[%s961 + $0x1c] sm:$0xf]
        %v970 = vld [vmem:[%s961 + $0x20] sm:$0xf]
        %v971 = vld [vmem:[%s961 + $0x24] sm:$0xf]
        %v972 = vld [vmem:[%s961 + $0x28] sm:$0xf]
        %v973 = vld [vmem:[%s961 + $0x2c] sm:$0xf]
        %v974 = vld [vmem:[%s961 + $0x30] sm:$0xf]
        %v975 = vld [vmem:[%s961 + $0x34] sm:$0xf]
        %v976 = vld [vmem:[%s961 + $0x38] sm:$0xf]
        %v977 = vld [vmem:[%s961 + $0x3c] sm:$0xf]
        %v978 = vld [vmem:[%s961 + $0x40] sm:$0xf]
        %v979 = vld [vmem:[%s961 + $0x44] sm:$0xf]
        %v984 = vrot.slane %v699, 1
        %v985 = vrot.slane %v701, 1
        %v986 = vsel %vm552, %v984, %v985
        %v987 = vrot.slane %v700, 1
        %v988 = vrot.slane %v702, 1
        %v989 = vsel %vm552, %v987, %v988
        %v1009 = vunpack.c.l.b16 %v962
        %v1010 = vunpack.c.l.b16 %v963
        %v1011 = vunpack.c.l.b16 %v964
        %v1012 = vunpack.c.l.b16 %v965
        %v1013 = vunpack.c.l.b16 %v966
        %v1014 = vunpack.c.l.b16 %v967
        %v1015 = vunpack.c.l.b16 %v968
        %v1016 = vunpack.c.l.b16 %v969
        %v1017 = vunpack.c.l.b16 %v970
        %v1018 = vunpack.c.l.b16 %v971
        %v1019 = vunpack.c.l.b16 %v972
        %v1020 = vunpack.c.l.b16 %v973
        %v1021 = vunpack.c.l.b16 %v974
        %v1022 = vunpack.c.l.b16 %v975
        %v1023 = vunpack.c.l.b16 %v976
        %v1024 = vunpack.c.l.b16 %v977
        %v1025 = vunpack.c.l.b16 %v978
        %v1026 = vunpack.c.l.b16 %v979
        %v1027 = vpack.c.b16 %v1010, %v1009
        %v1028 = vpack.c.b16 %v1012, %v1011
        %v1029 = vpack.c.b16 %v1014, %v1013
        %v1030 = vpack.c.b16 %v1016, %v1015
        %v1031 = vpack.c.b16 %v1018, %v1017
        %v1032 = vpack.c.b16 %v1020, %v1019
        %v1033 = vpack.c.b16 %v1022, %v1021
        %v1034 = vpack.c.b16 %v1024, %v1023
        %v1035 = vpack.c.b16 %v1026, %v1025
        %v1046 = vsel %vm819, %v989, 0
        %1048 = vmatprep.subr.bf16.mxu0 0
        %1049 = vmatpush1.bf16.msra.mxu0 %v1027
        %1050 = vmatprep.subr.bf16.mxu0 0
        %1051 = vmatpush1.bf16.msra.mxu0 %v1028
        %1052 = vmatprep.subr.bf16.mxu0 0
        %1053 = vmatpush1.bf16.msra.mxu0 %v1029
        %1054 = vmatprep.subr.bf16.mxu0 0
        %1055 = vmatpush1.bf16.msra.mxu0 %v1030
        %1056 = vmatprep.subr.bf16.mxu0 0
        %1057 = vmatpush1.bf16.msra.mxu0 %v1031
        %1058 = vmatprep.subr.bf16.mxu0 0
        %1059 = vmatpush1.bf16.msra.mxu0 %v1032
        %1060 = vmatprep.subr.bf16.mxu0 0
        %1061 = vmatpush1.bf16.msra.mxu0 %v1033
        %1062 = vmatprep.subr.bf16.mxu0 0
        %1063 = vmatpush1.bf16.msra.mxu0 %v1034
        %1064 = vmatprep.subr.bf16.mxu0 0
        %1065 = vmatpush1.bf16.msra.mxu0 %v1035
        %1066 = vmatprep.subr.bf16.mxu0 0
        %1067 = vmatpush1.bf16.msra.mxu0 0
        %1068 = vmatprep.subr.bf16.mxu0 0
        %1069 = vmatpush1.bf16.msra.mxu0 0
        %1070 = vmatprep.subr.bf16.mxu0 0
        %1071 = vmatpush1.bf16.msra.mxu0 0
        %1072 = vmatprep.subr.bf16.mxu0 0
        %1073 = vmatpush1.bf16.msra.mxu0 0
        %1074 = vmatprep.subr.bf16.mxu0 0
        %1075 = vmatpush1.bf16.msra.mxu0 0
        %1076 = vmatprep.subr.bf16.mxu0 0
        %1077 = vmatpush1.bf16.msra.mxu0 0
        %1078 = vmatprep.subr.bf16.mxu0 0
        %1079 = vmatpush1.bf16.msra.mxu0 0
        %1080 = vmatprep.mubr.bf16.mxu0 %v1046
        %1081 = vmatmul.mubr.bf16.gmra.mrb[0].mxu0 %v986
        %v1082 = vpop.f32.mrb[0].mxu0
        %v1083 = vadd.f32 0.0, %v1082
        %v1084 = vpop.f32.mrb[0].mxu0
        %v1085 = vpop.f32.mrb[0].mxu0
        %v1086 = vadd.f32 0.0, %v1085
        %v1087 = vpop.f32.mrb[0].mxu0
        %1088 = vdwg.mxu0
        %v1089 = vadd.f32 %v955, %v1083
        %v1090 = vadd.f32 %v958, %v1086
        %v1091 = vld [vmem:[%s269] sm:$0xff]
        %v1092 = vld [vmem:[%s269 + $0x8] sm:$0xff]
        %v1093 = vadd.f32 %v1089, %v1091
        %v1094 = vadd.f32 %v1090, %v1092
        %1095 = vst [vmem:[%s259] sm:$0xff] %v1093
        %1096 = vst [vmem:[%s259 + $0x8] sm:$0xff] %v1094
        %s1097 = sand.u32 %s164, 1
        %s1098 = scalar_lea.sflag [#allocation3], %s1097
        %s1099 = sand.u32 %s164, 1
        %s1100 = smul.addr %s1099, 16
        %s1101 = scalar_lea.vmem [#allocation2], %s1100
        // Predicated region
        $region45: #{tpu_custom_call.1} parent=43 // pred_check
          %p1102 = pneg %p174
        $region46: #{tpu_custom_call.1} parent=43 // pred_check_branch
          %1104 = sbr.rel (%p1102) target = $region48
        $region47: #{tpu_custom_call.1} parent=43 // pred_region
          %s1106 = ssub.s32 256, 256
          %1107 = vsyncadd %s1098, %s1106
          %s1108 = smul.addr %s20, 2
          %s1109 = smul.addr %s1108, 128
          %s1110 = scalar_lea.hbm %s6, %s1109
          %s1111 = sshll.u32 %s1101, 4
          %s1112 = int_to_ptr.vmem [resolvable:$true] %s1111
          %1117 = dma.vmem_to_hbm [thread:$0]  %s1112, 256, %s1110, %s1098, 128, 128, 8
        $region48: #{tpu_custom_call.1} parent=43 // pred_fallthru
          _
      $region44: #{tpu_custom_call.1} parent=5 // pred_fallthru
        _
      %p1118 = scmp.le.s32.totalorder 2, %s15
      // Predicated region
      $region49: #{tpu_custom_call.1} parent=5 // pred_check
        %p1119 = pneg %p1118
      $region50: #{tpu_custom_call.1} parent=5 // pred_check_branch
        %1121 = sbr.rel (%p1119) target = $region52
      $region51: #{tpu_custom_call.1} parent=5 // pred_region
        %s1122 = ssub.s32 %s15, 2
        // Predicated region
        $region53: #{tpu_custom_call.1} parent=51 // pred_check
          %p1123 = pneg %p180
        $region54: #{tpu_custom_call.1} parent=51 // pred_check_branch
          %1125 = sbr.rel (%p1123) target = $region56
        $region55: #{tpu_custom_call.1} parent=51 // pred_region
          %s1126 = sand.u32 %s165, 1
          %s1127 = scalar_lea.sflag [#allocation3], %s1126
          %s1128 = sand.u32 %s165, 1
          %s1129 = smul.addr %s1128, 16
          %s1130 = scalar_lea.vmem [#allocation2], %s1129
          %1131 = dma.done %s1127, 256
        $region56: #{tpu_custom_call.1} parent=51 // pred_fallthru
          _
      $region52: #{tpu_custom_call.1} parent=5 // pred_fallthru
        _
    $region6: #{tpu_custom_call.1} parent=1 // loop_footer
      %s19 = sadd.s32 1, %s15
    $region7: #{tpu_custom_call.1} parent=1 // loop_footer_branch
      %14 = sbr.rel target = $region3
    $region8: #{tpu_custom_call.1} parent=1 // loop_exit
      _
    %1132 = vsyncpa [#allocation3], 1
    %s1133 = scalar_lea.sflag [#allocation3], 1
    %1134 = vsyncpa %s1133, 1

</llo_original>
